<compile_context>
chip_gen: v7x
topology: tpu7x:2x2x1
jax: 0.10.0
libtpu: 0.0.40
codegen_flags: <defaults>
</compile_context>

<pallas_src>
import functools

import jax
import jax.numpy as jnp
from jax import lax
from jax.experimental import pallas as pl
from jax.experimental.pallas import tpu as pltpu

_VMEM_BUDGET = 48 << 20  # keep comfortably under v7x's 64 MiB physical VMEM


def _round_up(x, m):
    return ((x + m - 1) // m) * m


def _choose_tiling(m_pad, k, tk_req):
    """Pick (tm, tk_eff, k_pad) so acc + double-buffered inputs fit VMEM."""
    tk_eff = min(tk_req, _round_up(k, 128))
    # Shrink the K tile until the 2 inputs x 2 pipeline buffers fit half the budget.
    while 2 * 2 * m_pad * tk_eff * 4 > _VMEM_BUDGET // 2 and tk_eff > 128:
        tk_eff = max(128, (tk_eff // 2 // 128) * 128)
    k_pad = _round_up(k, tk_eff)

    acc_budget = _VMEM_BUDGET - 2 * 2 * m_pad * tk_eff * 4
    # Row-block the gram: large grams get >= 2 blocks (megacore / VMEM cap).
    tm = m_pad if m_pad < 1024 else m_pad // 2
    while tm * m_pad * 4 > acc_budget:
        nt = tm // 2
        if nt < 128 or nt % 128 != 0 or m_pad % nt != 0:
            break
        tm = nt
    return tm, tk_eff, k_pad


def _style_loss_kernel(pred_ref, targ_ref, out_ref, gd_acc, *, tm):
    """Grid = (gram row-blocks, K reduction steps).

    pred_ref / targ_ref : (M_pad, tk) VMEM slabs of the flattened features
    out_ref             : (1, 8, 128) per-row-block partial SSE (broadcast)
    gd_acc              : (tm, M_pad) f32 accumulator of raw(G_p) - raw(G_t)
    """
    i = pl.program_id(0)   # gram row-block
    kk = pl.program_id(1)  # K reduction step

    @pl.when(kk == 0)
    def _():
        gd_acc[...] = jnp.zeros_like(gd_acc)

    p_all = pred_ref[...]
    t_all = targ_ref[...]
    if tm == pred_ref.shape[0]:
        # Single row-block: reuse the full slab (no extra VMEM reads).
        p_rows, t_rows = p_all, t_all
    else:
        row0 = pl.multiple_of(i * tm, tm)
        p_rows = pred_ref[pl.ds(row0, tm), :]
        t_rows = targ_ref[pl.ds(row0, tm), :]

    # Contract K on both operands (A @ B.T) -- no transposed copy materialized.
    dn = (((1,), (1,)), ((), ()))
    dp = lax.dot_general(p_rows, p_all, dn, preferred_element_type=jnp.float32)
    dt = lax.dot_general(t_rows, t_all, dn, preferred_element_type=jnp.float32)
    gd_acc[...] = gd_acc[...] + dp - dt

    @pl.when(kk == pl.num_programs(1) - 1)
    def _():
        d = gd_acc[...]
        # Raw (unscaled) sum of squared gram differences for this row block;
        # all normalization constants are applied once, on the final scalar.
        out_ref[...] = jnp.full(out_ref.shape, jnp.sum(d * d), out_ref.dtype)


def style_loss(pred, target, *, tk=512):
    """MSE between gram matrices of pred and target (both NCHW, float32)."""
    assert pred.shape == target.shape, "pred/target must have the same shape"
    n, c, h, w = pred.shape
    m = n * c
    k = h * w

    feats_p = pred.reshape(m, k).astype(jnp.float32)
    feats_t = target.reshape(m, k).astype(jnp.float32)

    # Pad to TPU-friendly tiles. Zero padding is exact:
    #  - extra K columns add 0 to the gram accumulation,
    #  - extra M rows give identical (zero) gram entries for pred & target,
    # and divisors below use the *unpadded* sizes.
    m_pad = _round_up(m, 128)  # lane-dense gram accumulator / stores
    tm, tk_eff, k_pad = _choose_tiling(m_pad, k, tk)

    if (m_pad, k_pad) != (m, k):  # skip the HBM rewrite when already aligned
        feats_p = jnp.pad(feats_p, ((0, m_pad - m), (0, k_pad - k)))
        feats_t = jnp.pad(feats_t, ((0, m_pad - m), (0, k_pad - k)))

    n_m = m_pad // tm
    n_k = k_pad // tk_eff

    vmem_need = (tm * m_pad + 2 * 2 * m_pad * tk_eff + 2 * 8 * 128) * 4
    vmem_limit = int(min(64 << 20, max(vmem_need + (4 << 20), 16 << 20)))

    kernel = functools.partial(_style_loss_kernel, tm=tm)

    partials = pl.pallas_call(
        kernel,
        out_shape=jax.ShapeDtypeStruct((n_m, 8, 128), jnp.float32),
        grid_spec=pltpu.PrefetchScalarGridSpec(
            num_scalar_prefetch=0,
            grid=(n_m, n_k),
            in_specs=[
                pl.BlockSpec((m_pad, tk_eff), lambda i, kk: (0, kk)),
                pl.BlockSpec((m_pad, tk_eff), lambda i, kk: (0, kk)),
            ],
            out_specs=pl.BlockSpec((1, 8, 128), lambda i, kk: (i, 0, 0)),
            scratch_shapes=[pltpu.VMEM((tm, m_pad), jnp.float32)],
        ),
        compiler_params=pltpu.CompilerParams(
            dimension_semantics=("parallel", "arbitrary"),
            vmem_limit_bytes=vmem_limit,
        ),
    )(feats_p, feats_t)

    gram_div = float(n * c * h * w)  # torch: G.div(a*b*c*d)
    mse_div = float(m * m)           # MSE mean over the (M, M) gram
    scale = 1.0 / (gram_div * gram_div * mse_div)
    return jnp.sum(partials[:, 0, 0]) * scale


def _style_loss_ref(pred, target):
    """Pure-JAX reference mirroring the PyTorch module."""
    n, c, h, w = pred.shape
    fp = pred.reshape(n * c, h * w)
    ft = target.reshape(n * c, h * w)
    gp = (fp @ fp.T) / (n * c * h * w)
    gt = (ft @ ft.T) / (n * c * h * w)
    return jnp.mean((gp - gt) ** 2)


if __name__ == "__main__":
    key = jax.random.PRNGKey(0)
    kp, kt = jax.random.split(key)
    # NCHW feature maps, small shapes: batch=2, channels=4, spatial=16.
    pred = jax.random.normal(kp, (2, 4, 16, 16), dtype=jnp.float32)
    target = jax.random.normal(kt, (2, 4, 16, 16), dtype=jnp.float32)

    loss = jax.block_until_ready(style_loss(pred, target))
    ref = jax.block_until_ready(_style_loss_ref(pred, target))

    assert jnp.allclose(loss, ref, rtol=1e-5, atol=1e-6), (loss, ref)
    print("KERNEL_OK")
</pallas_src>

<mosaic_0001>
module attributes {stable_mosaic.version = 11 : i64} {
  func.func @_style_loss_kernel(%arg0: i32, %arg1: i32, %arg2: memref<128x256xf32, #tpu.memory_space<vmem>>, %arg3: memref<128x256xf32, #tpu.memory_space<vmem>>, %arg4: memref<1x8x128xf32, #tpu.memory_space<vmem>>, %arg5: memref<128x128xf32, #tpu.memory_space<vmem>>) attributes {dimension_semantics = [#tpu.dimension_semantics<parallel>, #tpu.dimension_semantics<arbitrary>], iteration_bounds = array<i64: 1, 1>, scalar_prefetch = 0 : i64, scratch_operands = 1 : i64, tpu.core_type = #tpu.core_type<tc>, window_params = [{transform_indices = @transform_0, window_bounds = array<i64: 128, 256>}, {transform_indices = @transform_1, window_bounds = array<i64: 128, 256>}, {transform_indices = @transform_2, window_bounds = array<i64: 1, 8, 128>}]} {
    %c0_i32 = arith.constant 0 : i32
    %0 = arith.cmpi eq, %arg1, %c0_i32 : i32
    %1 = arith.extui %0 : i1 to i32
    %c0_i32_0 = arith.constant 0 : i32
    %2 = arith.cmpi ne, %1, %c0_i32_0 : i32
    scf.if %2 {
      %cst_11 = arith.constant 0.000000e+00 : f32
      %14 = vector.broadcast %cst_11 : f32 to vector<128x128xf32>
      %c0_12 = arith.constant 0 : index
      %c0_13 = arith.constant 0 : index
      %15 = vector.load %arg5[%c0_12, %c0_13] : memref<128x128xf32, #tpu.memory_space<vmem>>, vector<128x128xf32>
      tpu.vector_store %arg5[%c0_12, %c0_13], %14 {strides = array<i32>} : memref<128x128xf32, #tpu.memory_space<vmem>>, vector<128x128xf32>,
    } else {
    }
    %c0 = arith.constant 0 : index
    %c0_1 = arith.constant 0 : index
    %3 = vector.load %arg2[%c0, %c0_1] : memref<128x256xf32, #tpu.memory_space<vmem>>, vector<128x256xf32>
    %c0_2 = arith.constant 0 : index
    %c0_3 = arith.constant 0 : index
    %4 = vector.load %arg3[%c0_2, %c0_3] : memref<128x256xf32, #tpu.memory_space<vmem>>, vector<128x256xf32>
    %cst = arith.constant dense<0.000000e+00> : vector<128x128xf32>
    %5 = tpu.matmul %3, %3, %cst {dimension_numbers = #tpu.dot_dimension_numbers<[1], [1], [0], [0], [0, 0, 1, 0], [], []>} : vector<128x256xf32>, vector<128x256xf32>, vector<128x128xf32> -> vector<128x128xf32>
    %cst_4 = arith.constant dense<0.000000e+00> : vector<128x128xf32>
    %6 = tpu.matmul %4, %4, %cst_4 {dimension_numbers = #tpu.dot_dimension_numbers<[1], [1], [0], [0], [0, 0, 1, 0], [], []>} : vector<128x256xf32>, vector<128x256xf32>, vector<128x128xf32> -> vector<128x128xf32>
    %c0_5 = arith.constant 0 : index
    %c0_6 = arith.constant 0 : index
    %7 = vector.load %arg5[%c0_5, %c0_6] : memref<128x128xf32, #tpu.memory_space<vmem>>, vector<128x128xf32>
    %8 = arith.addf %7, %5 : vector<128x128xf32>
    %9 = arith.subf %8, %6 : vector<128x128xf32>
    %c0_7 = arith.constant 0 : index
    %c0_8 = arith.constant 0 : index
    %10 = vector.load %arg5[%c0_7, %c0_8] : memref<128x128xf32, #tpu.memory_space<vmem>>, vector<128x128xf32>
    tpu.vector_store %arg5[%c0_7, %c0_8], %9 {strides = array<i32>} : memref<128x128xf32, #tpu.memory_space<vmem>>, vector<128x128xf32>,
    %c0_i32_9 = arith.constant 0 : i32
    %11 = arith.cmpi eq, %arg1, %c0_i32_9 : i32
    %12 = arith.extui %11 : i1 to i32
    %c0_i32_10 = arith.constant 0 : i32
    %13 = arith.cmpi ne, %12, %c0_i32_10 : i32
    scf.if %13 {
      %c0_11 = arith.constant 0 : index
      %c0_12 = arith.constant 0 : index
      %14 = vector.load %arg5[%c0_11, %c0_12] : memref<128x128xf32, #tpu.memory_space<vmem>>, vector<128x128xf32>
      %15 = arith.mulf %14, %14 : vector<128x128xf32>
      %16 = vector.shape_cast %15 : vector<128x128xf32> to vector<1x128x128xf32>
      %cst_13 = arith.constant dense<0.000000e+00> : vector<1xf32>
      %17 = vector.multi_reduction <add>, %16, %cst_13 [1, 2] : vector<1x128x128xf32> to vector<1xf32>
      %18 = vector.shape_cast %17 : vector<1xf32> to vector<1x1x1xf32>
      %19 = vector.extract %18[0, 0, 0] : f32 from vector<1x1x1xf32>
      %20 = vector.broadcast %19 : f32 to vector<1x8x128xf32>
      %c0_14 = arith.constant 0 : index
      %c0_15 = arith.constant 0 : index
      %c0_16 = arith.constant 0 : index
      %21 = vector.load %arg4[%c0_14, %c0_15, %c0_16] : memref<1x8x128xf32, #tpu.memory_space<vmem>>, vector<1x8x128xf32>
      tpu.vector_store %arg4[%c0_14, %c0_15, %c0_16], %20 {strides = array<i32>} : memref<1x8x128xf32, #tpu.memory_space<vmem>>, vector<1x8x128xf32>,
    } else {
    }
    return
  }
  func.func @transform_0(%arg0: i32, %arg1: i32) -> (i32, i32) {
    %c0_i32 = arith.constant 0 : i32
    %c0_i32_0 = arith.constant 0 : i32
    return %c0_i32, %arg1 : i32, i32
  }
  func.func @transform_1(%arg0: i32, %arg1: i32) -> (i32, i32) {
    %c0_i32 = arith.constant 0 : i32
    %c0_i32_0 = arith.constant 0 : i32
    return %c0_i32, %arg1 : i32, i32
  }
  func.func @transform_2(%arg0: i32, %arg1: i32) -> (i32, i32, i32) {
    %c0_i32 = arith.constant 0 : i32
    %c0_i32_0 = arith.constant 0 : i32
    %c0_i32_1 = arith.constant 0 : i32
    return %arg0, %c0_i32, %c0_i32_0 : i32, i32, i32
  }
}

</mosaic_0001>

<llo_original>
// kernel: tpu_custom_call.1
$region0: #{tpu_custom_call.1}
  #allocation0 [shape = 'u32[]', space=smem, size = 0x4, offset = 0x4, fixed_abs, tag = 'smem constant byte address 0x4 - core index']
  #allocation1 [shape = 'u32[144,128]{1,0:T(1,128)}', space=vmem, size = 0x12000, scoped, tag = 'internal scratch']
  #allocation2 [shape = 'f32[128,128]{1,0:T(8,128)}', space=vmem, size = 0x10000, scoped, tag = 'scratch operand']
  %s0 = inlined_call_operand.hbm [shape: f32[128,256], index: 0, kind: input, shape index: {}]
  %s1 = inlined_call_operand.hbm [shape: f32[128,256], index: 1, kind: input, shape index: {}]
  %s2 = inlined_call_operand.hbm [shape: f32[1,8,128], index: 2, kind: output, shape index: {}]
  %s3 = sld [smem:[#allocation0]]
  $region34: #{tpu_custom_call.1} parent=0
    _
  %s5 = ssub.s32 1, %s3
  %s6 = scalar_select 0, %s5, %s3
  $region1: #{tpu_custom_call.1} parent=0
    #allocation3 [shape = 'u8[131072]{0}', space=vmem, size = 0x20000, scoped, tag = 'input window, operand 0, single buffered']
    #allocation4 [shape = 's32[1]{0}', space=sflag, size = 0x4, scoped, tag = 'scoped memory for tpu_custom_call.1']
    #allocation5 [shape = 's32[1]{0}', space=sflag, size = 0x4, scoped, tag = 'scoped memory for tpu_custom_call.1']
    #allocation6 [shape = 'u8[131072]{0}', space=vmem, size = 0x20000, scoped, tag = 'input window, operand 1, single buffered']
    #allocation7 [shape = 's32[1]{0}', space=sflag, size = 0x4, scoped, tag = 'scoped memory for tpu_custom_call.1']
    #allocation8 [shape = 'u8[4096]{0}', space=vmem, size = 0x1000, scoped, tag = 'output window, operand 0, single buffered']
    %7 = vsyncpa [#allocation4], 0
    %8 = vsyncpa [#allocation7], 0
    %9 = vsyncpa [#allocation5], 0
    // Predicated region
    $region2: #{tpu_custom_call.1} parent=1 // pred_check
      _
    $region3: #{tpu_custom_call.1} parent=1 // pred_check_branch
      %11 = sbr.rel (0) target = $region5
    $region4: #{tpu_custom_call.1} parent=1 // pred_region
      %s13 = ssub.s32 4096, 4096
      %14 = vsyncadd [#allocation4], %s13
      %s15 = sshll.u32 [#allocation3], 4
      %s16 = int_to_ptr.vmem [resolvable:$true] %s15
      %21 = dma.hbm_to_vmem [thread:$0]  %s0, 4096, %s16, [#allocation4], 256, 256, 16
    $region5: #{tpu_custom_call.1} parent=1 // pred_fallthru
      _
    // Predicated region
    $region6: #{tpu_custom_call.1} parent=1 // pred_check
      _
    $region7: #{tpu_custom_call.1} parent=1 // pred_check_branch
      %23 = sbr.rel (0) target = $region9
    $region8: #{tpu_custom_call.1} parent=1 // pred_region
      %s25 = ssub.s32 4096, 4096
      %26 = vsyncadd [#allocation7], %s25
      %s27 = sshll.u32 [#allocation6], 4
      %s28 = int_to_ptr.vmem [resolvable:$true] %s27
      %33 = dma.hbm_to_vmem [thread:$0]  %s1, 4096, %s28, [#allocation7], 256, 256, 16
    $region9: #{tpu_custom_call.1} parent=1 // pred_fallthru
      _
    // Predicated region
    $region10: #{tpu_custom_call.1} parent=1 // pred_check
      _
    $region11: #{tpu_custom_call.1} parent=1 // pred_check_branch
      %35 = sbr.rel (0) target = $region13
    $region12: #{tpu_custom_call.1} parent=1 // pred_region
      %36 = dma.done [#allocation4], 4096
    $region13: #{tpu_custom_call.1} parent=1 // pred_fallthru
      _
    // Predicated region
    $region14: #{tpu_custom_call.1} parent=1 // pred_check
      _
    $region15: #{tpu_custom_call.1} parent=1 // pred_check_branch
      %38 = sbr.rel (0) target = $region17
    $region16: #{tpu_custom_call.1} parent=1 // pred_region
      %39 = dma.done [#allocation7], 4096
    $region17: #{tpu_custom_call.1} parent=1 // pred_fallthru
      _
    %p40 = scmp.eq.s32.totalorder 0, 0
    // Predicated region
    $region18: #{tpu_custom_call.1} parent=1 // pred_check
      %p41 = pneg %p40
    $region19: #{tpu_custom_call.1} parent=1 // pred_check_branch
      %43 = sbr.rel (%p41) target = $region21
    $region20: #{tpu_custom_call.1} parent=1 // pred_region
      %44 = vst [vmem:[#allocation2] sm:$0xff] 0.0
      %45 = vst [vmem:[#allocation2 + $0x8] sm:$0xff] 0.0
      %46 = vst [vmem:[#allocation2 + $0x10] sm:$0xff] 0.0
      %47 = vst [vmem:[#allocation2 + $0x18] sm:$0xff] 0.0
      %48 = vst [vmem:[#allocation2 + $0x20] sm:$0xff] 0.0
      %49 = vst [vmem:[#allocation2 + $0x28] sm:$0xff] 0.0
      %50 = vst [vmem:[#allocation2 + $0x30] sm:$0xff] 0.0
      %51 = vst [vmem:[#allocation2 + $0x38] sm:$0xff] 0.0
      %52 = vst [vmem:[#allocation2 + $0x40] sm:$0xff] 0.0
      %53 = vst [vmem:[#allocation2 + $0x48] sm:$0xff] 0.0
      %54 = vst [vmem:[#allocation2 + $0x50] sm:$0xff] 0.0
      %55 = vst [vmem:[#allocation2 + $0x58] sm:$0xff] 0.0
      %56 = vst [vmem:[#allocation2 + $0x60] sm:$0xff] 0.0
      %57 = vst [vmem:[#allocation2 + $0x68] sm:$0xff] 0.0
      %58 = vst [vmem:[#allocation2 + $0x70] sm:$0xff] 0.0
      %59 = vst [vmem:[#allocation2 + $0x78] sm:$0xff] 0.0
    $region21: #{tpu_custom_call.1} parent=1 // pred_fallthru
      _
    %v60 = vld [vmem:[#allocation3] sm:$0xff]
    %v61 = vld [vmem:[#allocation3 + $0x8] sm:$0xff]
    %v62 = vld [vmem:[#allocation3 + $0x10] sm:$0xff]
    %v63 = vld [vmem:[#allocation3 + $0x18] sm:$0xff]
    %v64 = vld [vmem:[#allocation3 + $0x20] sm:$0xff]
    %v65 = vld [vmem:[#allocation3 + $0x28] sm:$0xff]
    %v66 = vld [vmem:[#allocation3 + $0x30] sm:$0xff]
    %v67 = vld [vmem:[#allocation3 + $0x38] sm:$0xff]
    %v68 = vld [vmem:[#allocation3 + $0x40] sm:$0xff]
    %v69 = vld [vmem:[#allocation3 + $0x48] sm:$0xff]
    %v70 = vld [vmem:[#allocation3 + $0x50] sm:$0xff]
    %v71 = vld [vmem:[#allocation3 + $0x58] sm:$0xff]
    %v72 = vld [vmem:[#allocation3 + $0x60] sm:$0xff]
    %v73 = vld [vmem:[#allocation3 + $0x68] sm:$0xff]
    %v74 = vld [vmem:[#allocation3 + $0x70] sm:$0xff]
    %v75 = vld [vmem:[#allocation3 + $0x78] sm:$0xff]
    %v76 = vld [vmem:[#allocation3 + $0x80] sm:$0xff]
    %v77 = vld [vmem:[#allocation3 + $0x88] sm:$0xff]
    %v78 = vld [vmem:[#allocation3 + $0x90] sm:$0xff]
    %v79 = vld [vmem:[#allocation3 + $0x98] sm:$0xff]
    %v80 = vld [vmem:[#allocation3 + $0xa0] sm:$0xff]
    %v81 = vld [vmem:[#allocation3 + $0xa8] sm:$0xff]
    %v82 = vld [vmem:[#allocation3 + $0xb0] sm:$0xff]
    %v83 = vld [vmem:[#allocation3 + $0xb8] sm:$0xff]
    %v84 = vld [vmem:[#allocation3 + $0xc0] sm:$0xff]
    %v85 = vld [vmem:[#allocation3 + $0xc8] sm:$0xff]
    %v86 = vld [vmem:[#allocation3 + $0xd0] sm:$0xff]
    %v87 = vld [vmem:[#allocation3 + $0xd8] sm:$0xff]
    %v88 = vld [vmem:[#allocation3 + $0xe0] sm:$0xff]
    %v89 = vld [vmem:[#allocation3 + $0xe8] sm:$0xff]
    %v90 = vld [vmem:[#allocation3 + $0xf0] sm:$0xff]
    %v91 = vld [vmem:[#allocation3 + $0xf8] sm:$0xff]
    %v92 = vld [vmem:[#allocation6] sm:$0xff]
    %v93 = vld [vmem:[#allocation6 + $0x8] sm:$0xff]
    %v94 = vld [vmem:[#allocation6 + $0x10] sm:$0xff]
    %v95 = vld [vmem:[#allocation6 + $0x18] sm:$0xff]
    %v96 = vld [vmem:[#allocation6 + $0x20] sm:$0xff]
    %v97 = vld [vmem:[#allocation6 + $0x28] sm:$0xff]
    %v98 = vld [vmem:[#allocation6 + $0x30] sm:$0xff]
    %v99 = vld [vmem:[#allocation6 + $0x38] sm:$0xff]
    %v100 = vld [vmem:[#allocation6 + $0x40] sm:$0xff]
    %v101 = vld [vmem:[#allocation6 + $0x48] sm:$0xff]
    %v102 = vld [vmem:[#allocation6 + $0x50] sm:$0xff]
    %v103 = vld [vmem:[#allocation6 + $0x58] sm:$0xff]
    %v104 = vld [vmem:[#allocation6 + $0x60] sm:$0xff]
    %v105 = vld [vmem:[#allocation6 + $0x68] sm:$0xff]
    %v106 = vld [vmem:[#allocation6 + $0x70] sm:$0xff]
    %v107 = vld [vmem:[#allocation6 + $0x78] sm:$0xff]
    %v108 = vld [vmem:[#allocation6 + $0x80] sm:$0xff]
    %v109 = vld [vmem:[#allocation6 + $0x88] sm:$0xff]
    %v110 = vld [vmem:[#allocation6 + $0x90] sm:$0xff]
    %v111 = vld [vmem:[#allocation6 + $0x98] sm:$0xff]
    %v112 = vld [vmem:[#allocation6 + $0xa0] sm:$0xff]
    %v113 = vld [vmem:[#allocation6 + $0xa8] sm:$0xff]
    %v114 = vld [vmem:[#allocation6 + $0xb0] sm:$0xff]
    %v115 = vld [vmem:[#allocation6 + $0xb8] sm:$0xff]
    %v116 = vld [vmem:[#allocation6 + $0xc0] sm:$0xff]
    %v117 = vld [vmem:[#allocation6 + $0xc8] sm:$0xff]
    %v118 = vld [vmem:[#allocation6 + $0xd0] sm:$0xff]
    %v119 = vld [vmem:[#allocation6 + $0xd8] sm:$0xff]
    %v120 = vld [vmem:[#allocation6 + $0xe0] sm:$0xff]
    %v121 = vld [vmem:[#allocation6 + $0xe8] sm:$0xff]
    %v122 = vld [vmem:[#allocation6 + $0xf0] sm:$0xff]
    %v123 = vld [vmem:[#allocation6 + $0xf8] sm:$0xff]
    %124 = vmatprep.subr.mxu0 %v61
    %125 = vmatpush1.xpose.msra.mxu0 %v60
    %126 = vmatprep.subr.mxu0 %v63
    %127 = vmatpush1.xpose.msra.mxu0 %v62
    %128 = vmatprep.subr.mxu0 %v65
    %129 = vmatpush1.xpose.msra.mxu0 %v64
    %130 = vmatprep.subr.mxu0 %v67
    %131 = vmatpush1.xpose.msra.mxu0 %v66
    %132 = vmatprep.subr.mxu0 %v69
    %133 = vmatpush1.xpose.msra.mxu0 %v68
    %134 = vmatprep.subr.mxu0 %v71
    %135 = vmatpush1.xpose.msra.mxu0 %v70
    %136 = vmatprep.subr.mxu0 %v73
    %137 = vmatpush1.xpose.msra.mxu0 %v72
    %138 = vmatprep.subr.mxu0 %v75
    %139 = vmatpush1.xpose.msra.mxu0 %v74
    %140 = vmatprep.subr.mxu0 %v77
    %141 = vmatpush1.xpose.msra.mxu0 %v76
    %142 = vmatprep.subr.mxu0 %v79
    %143 = vmatpush1.xpose.msra.mxu0 %v78
    %144 = vmatprep.subr.mxu0 %v81
    %145 = vmatpush1.xpose.msra.mxu0 %v80
    %146 = vmatprep.subr.mxu0 %v83
    %147 = vmatpush1.xpose.msra.mxu0 %v82
    %148 = vmatprep.subr.mxu0 %v85
    %149 = vmatpush1.xpose.msra.mxu0 %v84
    %150 = vmatprep.subr.mxu0 %v87
    %151 = vmatpush1.xpose.msra.mxu0 %v86
    %152 = vmatprep.subr.mxu0 %v89
    %153 = vmatpush1.xpose.msra.mxu0 %v88
    %154 = vmatprep.subr.mxu0 %v91
    %155 = vmatpush1.xpose.msra.mxu0 %v90
    %156 = vmatprep.subr.mxu0 0.0
    %157 = vmatpush1.xpose.msra.mxu0 0.0
    %158 = vmatprep.subr.mxu0 0.0
    %159 = vmatpush1.xpose.msra.mxu0 0.0
    %160 = vmatprep.subr.mxu0 0.0
    %161 = vmatpush1.xpose.msra.mxu0 0.0
    %162 = vmatprep.subr.mxu0 0.0
    %163 = vmatpush1.xpose.msra.mxu0 0.0
    %164 = vmatprep.subr.mxu0 0.0
    %165 = vmatpush1.xpose.msra.mxu0 0.0
    %166 = vmatprep.subr.mxu0 0.0
    %167 = vmatpush1.xpose.msra.mxu0 0.0
    %168 = vmatprep.subr.mxu0 0.0
    %169 = vmatpush1.xpose.msra.mxu0 0.0
    %170 = vmatprep.subr.mxu0 0.0
    %171 = vmatpush1.xpose.msra.mxu0 0.0
    %172 = vmatprep.subr.mxu0 0.0
    %173 = vmatpush1.xpose.msra.mxu0 0.0
    %174 = vmatprep.subr.mxu0 0.0
    %175 = vmatpush1.xpose.msra.mxu0 0.0
    %176 = vmatprep.subr.mxu0 0.0
    %177 = vmatpush1.xpose.msra.mxu0 0.0
    %178 = vmatprep.subr.mxu0 0.0
    %179 = vmatpush1.xpose.msra.mxu0 0.0
    %180 = vmatprep.subr.mxu0 0.0
    %181 = vmatpush1.xpose.msra.mxu0 0.0
    %182 = vmatprep.subr.mxu0 0.0
    %183 = vmatpush1.xpose.msra.mxu0 0.0
    %184 = vmatprep.subr.mxu0 0.0
    %185 = vmatpush1.xpose.msra.mxu0 0.0
    %186 = vmatprep.subr.mxu0 0.0
    %187 = vmatpush1.xpose.msra.mxu0 0.0
    %188 = vmatprep.mubr.f32.mxu0 %v61
    %189 = vmatmul.mubr.f32.gmra.mrb[0].mxu0 %v60
    %v190 = vpop.f32.mrb[0].mxu0
    %v191 = vadd.f32 0.0, %v190
    %v192 = vpop.f32.mrb[0].mxu0
    %193 = vmatprep.mubr.f32.mxu0 %v63
    %194 = vmatmul.mubr.f32.gmra.mrb[0].mxu0 %v62
    %v195 = vpop.f32.mrb[0].mxu0
    %v196 = vadd.f32 0.0, %v195
    %v197 = vpop.f32.mrb[0].mxu0
    %198 = vmatprep.mubr.f32.mxu0 %v65
    %199 = vmatmul.mubr.f32.gmra.mrb[0].mxu0 %v64
    %v200 = vpop.f32.mrb[0].mxu0
    %v201 = vadd.f32 0.0, %v200
    %v202 = vpop.f32.mrb[0].mxu0
    %203 = vmatprep.mubr.f32.mxu0 %v67
    %204 = vmatmul.mubr.f32.gmra.mrb[0].mxu0 %v66
    %v205 = vpop.f32.mrb[0].mxu0
    %v206 = vadd.f32 0.0, %v205
    %v207 = vpop.f32.mrb[0].mxu0
    %208 = vmatprep.mubr.f32.mxu0 %v69
    %209 = vmatmul.mubr.f32.gmra.mrb[0].mxu0 %v68
    %v210 = vpop.f32.mrb[0].mxu0
    %v211 = vadd.f32 0.0, %v210
    %v212 = vpop.f32.mrb[0].mxu0
    %213 = vmatprep.mubr.f32.mxu0 %v71
    %214 = vmatmul.mubr.f32.gmra.mrb[0].mxu0 %v70
    %v215 = vpop.f32.mrb[0].mxu0
    %v216 = vadd.f32 0.0, %v215
    %v217 = vpop.f32.mrb[0].mxu0
    %218 = vmatprep.mubr.f32.mxu0 %v73
    %219 = vmatmul.mubr.f32.gmra.mrb[0].mxu0 %v72
    %v220 = vpop.f32.mrb[0].mxu0
    %v221 = vadd.f32 0.0, %v220
    %v222 = vpop.f32.mrb[0].mxu0
    %223 = vmatprep.mubr.f32.mxu0 %v75
    %224 = vmatmul.mubr.f32.gmra.mrb[0].mxu0 %v74
    %v225 = vpop.f32.mrb[0].mxu0
    %v226 = vadd.f32 0.0, %v225
    %v227 = vpop.f32.mrb[0].mxu0
    %228 = vmatprep.mubr.f32.mxu0 %v77
    %229 = vmatmul.mubr.f32.gmra.mrb[0].mxu0 %v76
    %v230 = vpop.f32.mrb[0].mxu0
    %v231 = vadd.f32 0.0, %v230
    %v232 = vpop.f32.mrb[0].mxu0
    %233 = vmatprep.mubr.f32.mxu0 %v79
    %234 = vmatmul.mubr.f32.gmra.mrb[0].mxu0 %v78
    %v235 = vpop.f32.mrb[0].mxu0
    %v236 = vadd.f32 0.0, %v235
    %v237 = vpop.f32.mrb[0].mxu0
    %238 = vmatprep.mubr.f32.mxu0 %v81
    %239 = vmatmul.mubr.f32.gmra.mrb[0].mxu0 %v80
    %v240 = vpop.f32.mrb[0].mxu0
    %v241 = vadd.f32 0.0, %v240
    %v242 = vpop.f32.mrb[0].mxu0
    %243 = vmatprep.mubr.f32.mxu0 %v83
    %244 = vmatmul.mubr.f32.gmra.mrb[0].mxu0 %v82
    %v245 = vpop.f32.mrb[0].mxu0
    %v246 = vadd.f32 0.0, %v245
    %v247 = vpop.f32.mrb[0].mxu0
    %248 = vmatprep.mubr.f32.mxu0 %v85
    %249 = vmatmul.mubr.f32.gmra.mrb[0].mxu0 %v84
    %v250 = vpop.f32.mrb[0].mxu0
    %v251 = vadd.f32 0.0, %v250
    %v252 = vpop.f32.mrb[0].mxu0
    %253 = vmatprep.mubr.f32.mxu0 %v87
    %254 = vmatmul.mubr.f32.gmra.mrb[0].mxu0 %v86
    %v255 = vpop.f32.mrb[0].mxu0
    %v256 = vadd.f32 0.0, %v255
    %v257 = vpop.f32.mrb[0].mxu0
    %258 = vmatprep.mubr.f32.mxu0 %v89
    %259 = vmatmul.mubr.f32.gmra.mrb[0].mxu0 %v88
    %v260 = vpop.f32.mrb[0].mxu0
    %v261 = vadd.f32 0.0, %v260
    %v262 = vpop.f32.mrb[0].mxu0
    %263 = vmatprep.mubr.f32.mxu0 %v91
    %264 = vmatmul.mubr.f32.gmra.mrb[0].mxu0 %v90
    %v265 = vpop.f32.mrb[0].mxu0
    %v266 = vadd.f32 0.0, %v265
    %v267 = vpop.f32.mrb[0].mxu0
    %268 = vdwg.mxu0
    %269 = vmatprep.subr.mxu0 %v93
    %270 = vmatpush1.xpose.msra.mxu0 %v92
    %271 = vmatprep.subr.mxu0 %v95
    %272 = vmatpush1.xpose.msra.mxu0 %v94
    %273 = vmatprep.subr.mxu0 %v97
    %274 = vmatpush1.xpose.msra.mxu0 %v96
    %275 = vmatprep.subr.mxu0 %v99
    %276 = vmatpush1.xpose.msra.mxu0 %v98
    %277 = vmatprep.subr.mxu0 %v101
    %278 = vmatpush1.xpose.msra.mxu0 %v100
    %279 = vmatprep.subr.mxu0 %v103
    %280 = vmatpush1.xpose.msra.mxu0 %v102
    %281 = vmatprep.subr.mxu0 %v105
    %282 = vmatpush1.xpose.msra.mxu0 %v104
    %283 = vmatprep.subr.mxu0 %v107
    %284 = vmatpush1.xpose.msra.mxu0 %v106
    %285 = vmatprep.subr.mxu0 %v109
    %286 = vmatpush1.xpose.msra.mxu0 %v108
    %287 = vmatprep.subr.mxu0 %v111
    %288 = vmatpush1.xpose.msra.mxu0 %v110
    %289 = vmatprep.subr.mxu0 %v113
    %290 = vmatpush1.xpose.msra.mxu0 %v112
    %291 = vmatprep.subr.mxu0 %v115
    %292 = vmatpush1.xpose.msra.mxu0 %v114
    %293 = vmatprep.subr.mxu0 %v117
    %294 = vmatpush1.xpose.msra.mxu0 %v116
    %295 = vmatprep.subr.mxu0 %v119
    %296 = vmatpush1.xpose.msra.mxu0 %v118
    %297 = vmatprep.subr.mxu0 %v121
    %298 = vmatpush1.xpose.msra.mxu0 %v120
    %299 = vmatprep.subr.mxu0 %v123
    %300 = vmatpush1.xpose.msra.mxu0 %v122
    %301 = vmatprep.subr.mxu0 0.0
    %302 = vmatpush1.xpose.msra.mxu0 0.0
    %303 = vmatprep.subr.mxu0 0.0
    %304 = vmatpush1.xpose.msra.mxu0 0.0
    %305 = vmatprep.subr.mxu0 0.0
    %306 = vmatpush1.xpose.msra.mxu0 0.0
    %307 = vmatprep.subr.mxu0 0.0
    %308 = vmatpush1.xpose.msra.mxu0 0.0
    %309 = vmatprep.subr.mxu0 0.0
    %310 = vmatpush1.xpose.msra.mxu0 0.0
    %311 = vmatprep.subr.mxu0 0.0
    %312 = vmatpush1.xpose.msra.mxu0 0.0
    %313 = vmatprep.subr.mxu0 0.0
    %314 = vmatpush1.xpose.msra.mxu0 0.0
    %315 = vmatprep.subr.mxu0 0.0
    %316 = vmatpush1.xpose.msra.mxu0 0.0
    %317 = vmatprep.subr.mxu0 0.0
    %318 = vmatpush1.xpose.msra.mxu0 0.0
    %319 = vmatprep.subr.mxu0 0.0
    %320 = vmatpush1.xpose.msra.mxu0 0.0
    %321 = vmatprep.subr.mxu0 0.0
    %322 = vmatpush1.xpose.msra.mxu0 0.0
    %323 = vmatprep.subr.mxu0 0.0
    %324 = vmatpush1.xpose.msra.mxu0 0.0
    %325 = vmatprep.subr.mxu0 0.0
    %326 = vmatpush1.xpose.msra.mxu0 0.0
    %327 = vmatprep.subr.mxu0 0.0
    %328 = vmatpush1.xpose.msra.mxu0 0.0
    %329 = vmatprep.subr.mxu0 0.0
    %330 = vmatpush1.xpose.msra.mxu0 0.0
    %331 = vmatprep.subr.mxu0 0.0
    %332 = vmatpush1.xpose.msra.mxu0 0.0
    %333 = vmatprep.mubr.f32.mxu0 %v93
    %334 = vmatmul.mubr.f32.gmra.mrb[0].mxu0 %v92
    %v335 = vpop.f32.mrb[0].mxu0
    %v336 = vadd.f32 0.0, %v335
    %v337 = vpop.f32.mrb[0].mxu0
    %338 = vmatprep.mubr.f32.mxu0 %v95
    %339 = vmatmul.mubr.f32.gmra.mrb[0].mxu0 %v94
    %v340 = vpop.f32.mrb[0].mxu0
    %v341 = vadd.f32 0.0, %v340
    %v342 = vpop.f32.mrb[0].mxu0
    %343 = vmatprep.mubr.f32.mxu0 %v97
    %344 = vmatmul.mubr.f32.gmra.mrb[0].mxu0 %v96
    %v345 = vpop.f32.mrb[0].mxu0
    %v346 = vadd.f32 0.0, %v345
    %v347 = vpop.f32.mrb[0].mxu0
    %348 = vmatprep.mubr.f32.mxu0 %v99
    %349 = vmatmul.mubr.f32.gmra.mrb[0].mxu0 %v98
    %v350 = vpop.f32.mrb[0].mxu0
    %v351 = vadd.f32 0.0, %v350
    %v352 = vpop.f32.mrb[0].mxu0
    %353 = vmatprep.mubr.f32.mxu0 %v101
    %354 = vmatmul.mubr.f32.gmra.mrb[0].mxu0 %v100
    %v355 = vpop.f32.mrb[0].mxu0
    %v356 = vadd.f32 0.0, %v355
    %v357 = vpop.f32.mrb[0].mxu0
    %358 = vmatprep.mubr.f32.mxu0 %v103
    %359 = vmatmul.mubr.f32.gmra.mrb[0].mxu0 %v102
    %v360 = vpop.f32.mrb[0].mxu0
    %v361 = vadd.f32 0.0, %v360
    %v362 = vpop.f32.mrb[0].mxu0
    %363 = vmatprep.mubr.f32.mxu0 %v105
    %364 = vmatmul.mubr.f32.gmra.mrb[0].mxu0 %v104
    %v365 = vpop.f32.mrb[0].mxu0
    %v366 = vadd.f32 0.0, %v365
    %v367 = vpop.f32.mrb[0].mxu0
    %368 = vmatprep.mubr.f32.mxu0 %v107
    %369 = vmatmul.mubr.f32.gmra.mrb[0].mxu0 %v106
    %v370 = vpop.f32.mrb[0].mxu0
    %v371 = vadd.f32 0.0, %v370
    %v372 = vpop.f32.mrb[0].mxu0
    %373 = vmatprep.mubr.f32.mxu0 %v109
    %374 = vmatmul.mubr.f32.gmra.mrb[0].mxu0 %v108
    %v375 = vpop.f32.mrb[0].mxu0
    %v376 = vadd.f32 0.0, %v375
    %v377 = vpop.f32.mrb[0].mxu0
    %378 = vmatprep.mubr.f32.mxu0 %v111
    %379 = vmatmul.mubr.f32.gmra.mrb[0].mxu0 %v110
    %v380 = vpop.f32.mrb[0].mxu0
    %v381 = vadd.f32 0.0, %v380
    %v382 = vpop.f32.mrb[0].mxu0
    %383 = vmatprep.mubr.f32.mxu0 %v113
    %384 = vmatmul.mubr.f32.gmra.mrb[0].mxu0 %v112
    %v385 = vpop.f32.mrb[0].mxu0
    %v386 = vadd.f32 0.0, %v385
    %v387 = vpop.f32.mrb[0].mxu0
    %388 = vmatprep.mubr.f32.mxu0 %v115
    %389 = vmatmul.mubr.f32.gmra.mrb[0].mxu0 %v114
    %v390 = vpop.f32.mrb[0].mxu0
    %v391 = vadd.f32 0.0, %v390
    %v392 = vpop.f32.mrb[0].mxu0
    %393 = vmatprep.mubr.f32.mxu0 %v117
    %394 = vmatmul.mubr.f32.gmra.mrb[0].mxu0 %v116
    %v395 = vpop.f32.mrb[0].mxu0
    %v396 = vadd.f32 0.0, %v395
    %v397 = vpop.f32.mrb[0].mxu0
    %398 = vmatprep.mubr.f32.mxu0 %v119
    %399 = vmatmul.mubr.f32.gmra.mrb[0].mxu0 %v118
    %v400 = vpop.f32.mrb[0].mxu0
    %v401 = vadd.f32 0.0, %v400
    %v402 = vpop.f32.mrb[0].mxu0
    %403 = vmatprep.mubr.f32.mxu0 %v121
    %404 = vmatmul.mubr.f32.gmra.mrb[0].mxu0 %v120
    %v405 = vpop.f32.mrb[0].mxu0
    %v406 = vadd.f32 0.0, %v405
    %v407 = vpop.f32.mrb[0].mxu0
    %408 = vmatprep.mubr.f32.mxu0 %v123
    %409 = vmatmul.mubr.f32.gmra.mrb[0].mxu0 %v122
    %v410 = vpop.f32.mrb[0].mxu0
    %v411 = vadd.f32 0.0, %v410
    %v412 = vpop.f32.mrb[0].mxu0
    %413 = vdwg.mxu0
    %v414 = vld [vmem:[#allocation2] sm:$0xff]
    %v415 = vld [vmem:[#allocation2 + $0x8] sm:$0xff]
    %v416 = vld [vmem:[#allocation2 + $0x10] sm:$0xff]
    %v417 = vld [vmem:[#allocation2 + $0x18] sm:$0xff]
    %v418 = vld [vmem:[#allocation2 + $0x20] sm:$0xff]
    %v419 = vld [vmem:[#allocation2 + $0x28] sm:$0xff]
    %v420 = vld [vmem:[#allocation2 + $0x30] sm:$0xff]
    %v421 = vld [vmem:[#allocation2 + $0x38] sm:$0xff]
    %v422 = vld [vmem:[#allocation2 + $0x40] sm:$0xff]
    %v423 = vld [vmem:[#allocation2 + $0x48] sm:$0xff]
    %v424 = vld [vmem:[#allocation2 + $0x50] sm:$0xff]
    %v425 = vld [vmem:[#allocation2 + $0x58] sm:$0xff]
    %v426 = vld [vmem:[#allocation2 + $0x60] sm:$0xff]
    %v427 = vld [vmem:[#allocation2 + $0x68] sm:$0xff]
    %v428 = vld [vmem:[#allocation2 + $0x70] sm:$0xff]
    %v429 = vld [vmem:[#allocation2 + $0x78] sm:$0xff]
    %v430 = vadd.f32 %v414, %v191
    %v431 = vadd.f32 %v415, %v196
    %v432 = vadd.f32 %v416, %v201
    %v433 = vadd.f32 %v417, %v206
    %v434 = vadd.f32 %v418, %v211
    %v435 = vadd.f32 %v419, %v216
    %v436 = vadd.f32 %v420, %v221
    %v437 = vadd.f32 %v421, %v226
    %v438 = vadd.f32 %v422, %v231
    %v439 = vadd.f32 %v423, %v236
    %v440 = vadd.f32 %v424, %v241
    %v441 = vadd.f32 %v425, %v246
    %v442 = vadd.f32 %v426, %v251
    %v443 = vadd.f32 %v427, %v256
    %v444 = vadd.f32 %v428, %v261
    %v445 = vadd.f32 %v429, %v266
    %v446 = vsub.f32 %v430, %v336
    %v447 = vsub.f32 %v431, %v341
    %v448 = vsub.f32 %v432, %v346
    %v449 = vsub.f32 %v433, %v351
    %v450 = vsub.f32 %v434, %v356
    %v451 = vsub.f32 %v435, %v361
    %v452 = vsub.f32 %v436, %v366
    %v453 = vsub.f32 %v437, %v371
    %v454 = vsub.f32 %v438, %v376
    %v455 = vsub.f32 %v439, %v381
    %v456 = vsub.f32 %v440, %v386
    %v457 = vsub.f32 %v441, %v391
    %v458 = vsub.f32 %v442, %v396
    %v459 = vsub.f32 %v443, %v401
    %v460 = vsub.f32 %v444, %v406
    %v461 = vsub.f32 %v445, %v411
    %462 = vst [vmem:[#allocation2] sm:$0xff] %v446
    %463 = vst [vmem:[#allocation2 + $0x8] sm:$0xff] %v447
    %464 = vst [vmem:[#allocation2 + $0x10] sm:$0xff] %v448
    %465 = vst [vmem:[#allocation2 + $0x18] sm:$0xff] %v449
    %466 = vst [vmem:[#allocation2 + $0x20] sm:$0xff] %v450
    %467 = vst [vmem:[#allocation2 + $0x28] sm:$0xff] %v451
    %468 = vst [vmem:[#allocation2 + $0x30] sm:$0xff] %v452
    %469 = vst [vmem:[#allocation2 + $0x38] sm:$0xff] %v453
    %470 = vst [vmem:[#allocation2 + $0x40] sm:$0xff] %v454
    %471 = vst [vmem:[#allocation2 + $0x48] sm:$0xff] %v455
    %472 = vst [vmem:[#allocation2 + $0x50] sm:$0xff] %v456
    %473 = vst [vmem:[#allocation2 + $0x58] sm:$0xff] %v457
    %474 = vst [vmem:[#allocation2 + $0x60] sm:$0xff] %v458
    %475 = vst [vmem:[#allocation2 + $0x68] sm:$0xff] %v459
    %476 = vst [vmem:[#allocation2 + $0x70] sm:$0xff] %v460
    %477 = vst [vmem:[#allocation2 + $0x78] sm:$0xff] %v461
    // Predicated region
    $region22: #{tpu_custom_call.1} parent=1 // pred_check
      %p478 = pneg %p40
    $region23: #{tpu_custom_call.1} parent=1 // pred_check_branch
      %480 = sbr.rel (%p478) target = $region25
    $region24: #{tpu_custom_call.1} parent=1 // pred_region
      %v481 = vld [vmem:[#allocation2] sm:$0xff]
      %v482 = vld [vmem:[#allocation2 + $0x8] sm:$0xff]
      %v483 = vld [vmem:[#allocation2 + $0x10] sm:$0xff]
      %v484 = vld [vmem:[#allocation2 + $0x18] sm:$0xff]
      %v485 = vld [vmem:[#allocation2 + $0x20] sm:$0xff]
      %v486 = vld [vmem:[#allocation2 + $0x28] sm:$0xff]
      %v487 = vld [vmem:[#allocation2 + $0x30] sm:$0xff]
      %v488 = vld [vmem:[#allocation2 + $0x38] sm:$0xff]
      %v489 = vld [vmem:[#allocation2 + $0x40] sm:$0xff]
      %v490 = vld [vmem:[#allocation2 + $0x48] sm:$0xff]
      %v491 = vld [vmem:[#allocation2 + $0x50] sm:$0xff]
      %v492 = vld [vmem:[#allocation2 + $0x58] sm:$0xff]
      %v493 = vld [vmem:[#allocation2 + $0x60] sm:$0xff]
      %v494 = vld [vmem:[#allocation2 + $0x68] sm:$0xff]
      %v495 = vld [vmem:[#allocation2 + $0x70] sm:$0xff]
      %v496 = vld [vmem:[#allocation2 + $0x78] sm:$0xff]
      %v497 = vmul.f32 %v481, %v481
      %v498 = vmul.f32 %v482, %v482
      %v499 = vmul.f32 %v483, %v483
      %v500 = vmul.f32 %v484, %v484
      %v501 = vmul.f32 %v485, %v485
      %v502 = vmul.f32 %v486, %v486
      %v503 = vmul.f32 %v487, %v487
      %v504 = vmul.f32 %v488, %v488
      %v505 = vmul.f32 %v489, %v489
      %v506 = vmul.f32 %v490, %v490
      %v507 = vmul.f32 %v491, %v491
      %v508 = vmul.f32 %v492, %v492
      %v509 = vmul.f32 %v493, %v493
      %v510 = vmul.f32 %v494, %v494
      %v511 = vmul.f32 %v495, %v495
      %v512 = vmul.f32 %v496, %v496
      %v513 = vadd.f32 %v497, %v498
      %v514 = vadd.f32 %v513, %v499
      %v515 = vadd.f32 %v514, %v500
      %v516 = vadd.f32 %v515, %v501
      %v517 = vadd.f32 %v516, %v502
      %v518 = vadd.f32 %v517, %v503
      %v519 = vadd.f32 %v518, %v504
      %v520 = vadd.f32 %v519, %v505
      %v521 = vadd.f32 %v520, %v506
      %v522 = vadd.f32 %v521, %v507
      %v523 = vadd.f32 %v522, %v508
      %v524 = vadd.f32 %v523, %v509
      %v525 = vadd.f32 %v524, %v510
      %v526 = vadd.f32 %v525, %v511
      %v527 = vadd.f32 %v526, %v512
      %528 = vadd.xlane.f32.xlu0 %v527
      %v529 = vpop.xlane.xlu0 %528
      %v530 = vrot.slane %v529, 4
      %v531 = vadd.f32 %v529, %v530
      %v532 = vrot.slane %v531, 2
      %v533 = vadd.f32 %v531, %v532
      %v534 = vrot.slane %v533, 1
      %v535 = vadd.f32 %v533, %v534
      %s536 = vtos %v535
      %v537 = vstv %s536
      %538 = vst [vmem:[#allocation8] sm:$0xff] %v537
    $region25: #{tpu_custom_call.1} parent=1 // pred_fallthru
      _
    // Predicated region
    $region26: #{tpu_custom_call.1} parent=1 // pred_check
      _
    $region27: #{tpu_custom_call.1} parent=1 // pred_check_branch
      %540 = sbr.rel (0) target = $region29
    $region28: #{tpu_custom_call.1} parent=1 // pred_region
      %s542 = ssub.s32 128, 128
      %543 = vsyncadd [#allocation5], %s542
      %s545 = sshll.u32 [#allocation8], 4
      %s546 = int_to_ptr.vmem [resolvable:$true] %s545
      %548 = dma.vmem_to_hbm [thread:$0]  %s546, 128, %s2, [#allocation5]
    $region29: #{tpu_custom_call.1} parent=1 // pred_fallthru
      _
    // Predicated region
    $region30: #{tpu_custom_call.1} parent=1 // pred_check
      _
    $region31: #{tpu_custom_call.1} parent=1 // pred_check_branch
      %550 = sbr.rel (0) target = $region33
    $region32: #{tpu_custom_call.1} parent=1 // pred_region
      %551 = dma.done [#allocation5], 128
    $region33: #{tpu_custom_call.1} parent=1 // pred_fallthru
      _
    %552 = vsyncpa [#allocation4], 1
    %553 = vsyncpa [#allocation7], 1
    %554 = vsyncpa [#allocation5], 1

</llo_original>
